<compile_context>
chip_gen: v7x
topology: tpu7x:2x2x1
jax: 0.10.0
libtpu: 0.0.40
codegen_flags: <defaults>
</compile_context>

<pallas_src>
import functools

import jax
import jax.numpy as jnp
from jax.experimental import pallas as pl
from jax.experimental.pallas import tpu as pltpu


def _round_up(x, m):
    return (x + m - 1) // m * m


# ---------------------------------------------------------------------------
# Fused kernel: the entire prediction head for one batch tile.
# refs = (x_tile, w0, b0, w1, b1, ..., out_tile); weights/biases are resident.
# ---------------------------------------------------------------------------
def _fused_head_kernel(*refs, layer_kinds, residual, dims):
    x_ref = refs[0]
    o_ref = refs[-1]
    params = refs[1:-1]

    x = x_ref[...].astype(jnp.float32)     # f32 activation chain
    input_x = x
    current_idx = 0
    p = 0
    for kind in layer_kinds:               # unrolled at trace time
        if kind == "linear":
            w = params[p][...]                                  # bf16 (in, out)
            b = params[p + 1][...].astype(jnp.float32)          # (1, out) f32
            p += 2
            # bf16 MXU pass, f32 accumulate; bias/residual epilogue in f32.
            x = jnp.dot(x.astype(w.dtype), w,
                        preferred_element_type=jnp.float32) + b
            if residual and (dims[current_idx] == dims[current_idx + 1]):
                x = x + input_x            # fused residual add (matches PyTorch)
                input_x = x
                current_idx += 1
        elif kind == "relu":
            x = jnp.maximum(x, 0.0)        # free VPU epilogue
        else:
            raise ValueError(f"unknown layer kind {kind!r}")
    o_ref[...] = x.astype(o_ref.dtype)


# ---------------------------------------------------------------------------
# One-time parameter conversion (do OUTSIDE the jitted forward).
# PyTorch (out, in) weight -> transposed (in, out) bf16; bias -> (1, out) f32.
# No feature-dim padding: block shapes equal the full array dims.
# ---------------------------------------------------------------------------
def prepare_params(layers, *, param_dtype=jnp.bfloat16):
    prepared = []
    for layer in layers:
        if layer[0] == "linear":
            _, w, b = layer
            prepared.append(("linear",
                             jnp.asarray(w.T, dtype=param_dtype),
                             jnp.asarray(b, dtype=jnp.float32).reshape(1, -1)))
        elif layer[0] == "relu":
            prepared.append(("relu",))
        else:
            # TODO(synk): only nn.Linear / nn.ReLU layer types are translated;
            # other nn modules in the generic ModuleList have no mapping here.
            raise ValueError(f"unsupported layer {layer[0]!r}")
    return prepared


def _choose_tm(n, block_rows):
    """Batch tile: multiple of 8 (or == n), capped, >=2 grid steps for v7x."""
    if n <= 8:
        return n                               # single full-array block
    tm = min(block_rows, _round_up(n, 8))
    if pl.cdiv(n, tm) < 2:
        # v7x has 2 TensorCores: split a single-tile batch into 2 parallel steps
        # (no effect on v5e/v6e which have 1 TC).
        tm = _round_up(pl.cdiv(n, 2), 8)
    return tm


def _resident_spec(shape, single_buffer):
    """Constant index_map -> tensor stays resident in VMEM across batch tiles."""
    index_map = lambda i: (0,) * len(shape)
    if single_buffer and hasattr(pl, "Buffered"):
        # Single-buffer the resident weights/bias: constant index_map never
        # re-DMAs, so the second pipeline buffer is pure wasted VMEM.
        return pl.BlockSpec(shape, index_map, pipeline_mode=pl.Buffered(1))
    return pl.BlockSpec(shape, index_map)


# ---------------------------------------------------------------------------
# Fused forward: single pallas_call, batch-tiled parallel grid, resident weights.
# ---------------------------------------------------------------------------
def prediction_head_forward(x, prepared_layers, residual, dims, *,
                            block_rows=1024, single_buffer_weights=True):
    n, din = x.shape

    dout = din
    for lyr in prepared_layers:
        if lyr[0] == "linear":
            dout = lyr[1].shape[1]

    tm = _choose_tm(n, block_rows)
    grid = (pl.cdiv(n, tm),)                 # ragged tail handled by Pallas masking

    layer_kinds = tuple(lyr[0] for lyr in prepared_layers)
    params = []
    in_specs = [pl.BlockSpec((tm, din), lambda i: (i, 0))]
    for lyr in prepared_layers:
        if lyr[0] == "linear":
            w_t, b2 = lyr[1], lyr[2]
            params += [w_t, b2]
            in_specs += [_resident_spec(w_t.shape, single_buffer_weights),
                         _resident_spec(b2.shape, single_buffer_weights)]

    # TODO(synk): for very large hidden dims (resident bf16 weights approaching
    # ~half of VMEM on v7x), switch to tiling the output dim over the grid
    # instead of keeping every weight resident.

    # Explicit VMEM allowance (v5e scoped default is only 16 MiB).
    weight_bytes = sum(int(p.size) * p.dtype.itemsize for p in params)
    buf_count = 1 if single_buffer_weights else 2
    act_bytes = 2 * tm * din * x.dtype.itemsize + 2 * tm * dout * 4
    vmem_limit_bytes = int(min(buf_count * weight_bytes + act_bytes + (16 << 20),
                               110 << 20))

    kernel = functools.partial(
        _fused_head_kernel,
        layer_kinds=layer_kinds,
        residual=residual,
        dims=tuple(dims),
    )

    return pl.pallas_call(
        kernel,
        out_shape=jax.ShapeDtypeStruct((n, dout), x.dtype),
        grid=grid,
        in_specs=in_specs,
        out_specs=pl.BlockSpec((tm, dout), lambda i: (i, 0)),
        compiler_params=pltpu.CompilerParams(
            dimension_semantics=("parallel",),      # shards tiles across v7x's 2 TCs
            vmem_limit_bytes=vmem_limit_bytes),
    )(x, *params)


# ---------------------------------------------------------------------------
# Pure-JAX reference (original PyTorch-layout f32 params).
# ---------------------------------------------------------------------------
def prediction_head_ref(x, layers, residual, dims):
    input_x = x
    current_idx = 0
    for layer in layers:
        if layer[0] == "linear":
            _, w, b = layer
            x = x @ w.T + b
            if residual and (dims[current_idx] == dims[current_idx + 1]):
                x = x + input_x
                input_x = x
                current_idx += 1
        elif layer[0] == "relu":
            x = jnp.maximum(x, 0)
    return x


if __name__ == "__main__":
    key = jax.random.PRNGKey(0)

    batch = 8
    hidden = 32
    out_dim = 16
    dims = [hidden, hidden, hidden, out_dim]   # dims[i] -> dims[i+1] per Linear
    residual = True

    # Deterministic parameter init (PyTorch Linear weight layout: (out, in)).
    k0, k1, k2, k3, k4, k5, kx, kx2 = jax.random.split(key, 8)
    w0 = jax.random.normal(k0, (hidden, hidden), jnp.float32) * 0.1
    b0 = jax.random.normal(k1, (hidden,), jnp.float32) * 0.01
    w1 = jax.random.normal(k2, (hidden, hidden), jnp.float32) * 0.1
    b1 = jax.random.normal(k3, (hidden,), jnp.float32) * 0.01
    w2 = jax.random.normal(k4, (out_dim, hidden), jnp.float32) * 0.1
    b2 = jax.random.normal(k5, (out_dim,), jnp.float32) * 0.01

    layers = [
        ("linear", w0, b0),   # 32 -> 32, residual applied
        ("relu",),
        ("linear", w1, b1),   # 32 -> 32, residual applied
        ("relu",),
        ("linear", w2, b2),   # 32 -> 16, no residual
    ]

    x = jax.random.normal(kx, (batch, hidden), jnp.float32)
    x_large = jax.random.normal(kx2, (48, hidden), jnp.float32)  # multi-tile path

    # One-time parameter conversion (outside jit): transpose + bf16 weights.
    prepared = prepare_params(layers)

    def make_fwd(single_buffer):
        return jax.jit(functools.partial(
            prediction_head_forward,
            prepared_layers=prepared, residual=residual, dims=tuple(dims),
            single_buffer_weights=single_buffer))

    fwd = make_fwd(True)
    try:
        y = fwd(x)
        jax.block_until_ready(y)
    except Exception:
        # pl.Buffered(1) plumb-through varies across Pallas versions; fall back
        # to default double-buffered resident weights (still correct).
        fwd = make_fwd(False)
        y = fwd(x)
        jax.block_until_ready(y)

    y_large = fwd(x_large)
    jax.block_until_ready(y_large)

    # bf16-MXU math (same as TPU default matmul precision) -> not bit-equal to f32.
    y_ref = prediction_head_ref(x, layers, residual, dims)
    y_large_ref = prediction_head_ref(x_large, layers, residual, dims)
    assert y.shape == (batch, out_dim), y.shape
    assert y_large.shape == (48, out_dim), y_large.shape
    assert jnp.allclose(y, y_ref, atol=2e-2, rtol=2e-2), "mismatch vs reference"
    assert jnp.allclose(y_large, y_large_ref, atol=2e-2, rtol=2e-2), \
        "mismatch vs reference (multi-tile)"

    print("KERNEL_OK")
</pallas_src>

<mosaic_0001>
module attributes {stable_mosaic.version = 11 : i64} {
  func.func @_fused_head_kernel(%arg0: i32, %arg1: memref<8x32xf32, #tpu.memory_space<vmem>>, %arg2: memref<32x32xbf16, #tpu.memory_space<vmem>>, %arg3: memref<1x32xf32, #tpu.memory_space<vmem>>, %arg4: memref<32x32xbf16, #tpu.memory_space<vmem>>, %arg5: memref<1x32xf32, #tpu.memory_space<vmem>>, %arg6: memref<32x16xbf16, #tpu.memory_space<vmem>>, %arg7: memref<1x16xf32, #tpu.memory_space<vmem>>, %arg8: memref<8x16xf32, #tpu.memory_space<vmem>>) attributes {dimension_semantics = [#tpu.dimension_semantics<parallel>], iteration_bounds = array<i64: 1>, scalar_prefetch = 0 : i64, scratch_operands = 0 : i64, tpu.core_type = #tpu.core_type<tc>, window_params = [{transform_indices = @transform_0, window_bounds = array<i64: 8, 32>}, {pipeline_mode = #tpu.pipeline_mode<synchronous>, transform_indices = @transform_1, window_bounds = array<i64: 32, 32>}, {pipeline_mode = #tpu.pipeline_mode<synchronous>, transform_indices = @transform_2, window_bounds = array<i64: 1, 32>}, {pipeline_mode = #tpu.pipeline_mode<synchronous>, transform_indices = @transform_3, window_bounds = array<i64: 32, 32>}, {pipeline_mode = #tpu.pipeline_mode<synchronous>, transform_indices = @transform_4, window_bounds = array<i64: 1, 32>}, {pipeline_mode = #tpu.pipeline_mode<synchronous>, transform_indices = @transform_5, window_bounds = array<i64: 32, 16>}, {pipeline_mode = #tpu.pipeline_mode<synchronous>, transform_indices = @transform_6, window_bounds = array<i64: 1, 16>}, {transform_indices = @transform_7, window_bounds = array<i64: 8, 16>}]} {
    %c0 = arith.constant 0 : index
    %c0_0 = arith.constant 0 : index
    %0 = vector.load %arg1[%c0, %c0_0] : memref<8x32xf32, #tpu.memory_space<vmem>>, vector<8x32xf32>
    %c0_1 = arith.constant 0 : index
    %c0_2 = arith.constant 0 : index
    %1 = vector.load %arg2[%c0_1, %c0_2] : memref<32x32xbf16, #tpu.memory_space<vmem>>, vector<32x32xbf16>
    %c0_3 = arith.constant 0 : index
    %c0_4 = arith.constant 0 : index
    %2 = vector.load %arg3[%c0_3, %c0_4] : memref<1x32xf32, #tpu.memory_space<vmem>>, vector<1x32xf32>
    %3 = arith.truncf %0 : vector<8x32xf32> to vector<8x32xbf16>
    %cst = arith.constant dense<0.000000e+00> : vector<8x32xf32>
    %4 = tpu.matmul %3, %1, %cst {dimension_numbers = #tpu.dot_dimension_numbers<[1], [0], [0], [1], [0, 0, 1, 1], [], []>} : vector<8x32xbf16>, vector<32x32xbf16>, vector<8x32xf32> -> vector<8x32xf32>
    %5 = vector.broadcast %2 : vector<1x32xf32> to vector<8x32xf32>
    %6 = arith.addf %4, %5 : vector<8x32xf32>
    %7 = arith.addf %6, %0 : vector<8x32xf32>
    %cst_5 = arith.constant 0.000000e+00 : f32
    %8 = vector.broadcast %cst_5 : f32 to vector<8x32xf32>
    %9 = arith.maximumf %7, %8 : vector<8x32xf32>
    %c0_6 = arith.constant 0 : index
    %c0_7 = arith.constant 0 : index
    %10 = vector.load %arg4[%c0_6, %c0_7] : memref<32x32xbf16, #tpu.memory_space<vmem>>, vector<32x32xbf16>
    %c0_8 = arith.constant 0 : index
    %c0_9 = arith.constant 0 : index
    %11 = vector.load %arg5[%c0_8, %c0_9] : memref<1x32xf32, #tpu.memory_space<vmem>>, vector<1x32xf32>
    %12 = arith.truncf %9 : vector<8x32xf32> to vector<8x32xbf16>
    %cst_10 = arith.constant dense<0.000000e+00> : vector<8x32xf32>
    %13 = tpu.matmul %12, %10, %cst_10 {dimension_numbers = #tpu.dot_dimension_numbers<[1], [0], [0], [1], [0, 0, 1, 1], [], []>} : vector<8x32xbf16>, vector<32x32xbf16>, vector<8x32xf32> -> vector<8x32xf32>
    %14 = vector.broadcast %11 : vector<1x32xf32> to vector<8x32xf32>
    %15 = arith.addf %13, %14 : vector<8x32xf32>
    %16 = arith.addf %15, %7 : vector<8x32xf32>
    %cst_11 = arith.constant 0.000000e+00 : f32
    %17 = vector.broadcast %cst_11 : f32 to vector<8x32xf32>
    %18 = arith.maximumf %16, %17 : vector<8x32xf32>
    %c0_12 = arith.constant 0 : index
    %c0_13 = arith.constant 0 : index
    %19 = vector.load %arg6[%c0_12, %c0_13] : memref<32x16xbf16, #tpu.memory_space<vmem>>, vector<32x16xbf16>
    %c0_14 = arith.constant 0 : index
    %c0_15 = arith.constant 0 : index
    %20 = vector.load %arg7[%c0_14, %c0_15] : memref<1x16xf32, #tpu.memory_space<vmem>>, vector<1x16xf32>
    %21 = arith.truncf %18 : vector<8x32xf32> to vector<8x32xbf16>
    %cst_16 = arith.constant dense<0.000000e+00> : vector<8x16xf32>
    %22 = tpu.matmul %21, %19, %cst_16 {dimension_numbers = #tpu.dot_dimension_numbers<[1], [0], [0], [1], [0, 0, 1, 1], [], []>} : vector<8x32xbf16>, vector<32x16xbf16>, vector<8x16xf32> -> vector<8x16xf32>
    %23 = vector.broadcast %20 : vector<1x16xf32> to vector<8x16xf32>
    %24 = arith.addf %22, %23 : vector<8x16xf32>
    %c0_17 = arith.constant 0 : index
    %c0_18 = arith.constant 0 : index
    %25 = vector.load %arg8[%c0_17, %c0_18] : memref<8x16xf32, #tpu.memory_space<vmem>>, vector<8x16xf32>
    tpu.vector_store %arg8[%c0_17, %c0_18], %24 {strides = array<i32>} : memref<8x16xf32, #tpu.memory_space<vmem>>, vector<8x16xf32>,
    return
  }
  func.func @transform_0(%arg0: i32) -> (i32, i32) {
    %c0_i32 = arith.constant 0 : i32
    %c0_i32_0 = arith.constant 0 : i32
    return %arg0, %c0_i32 : i32, i32
  }
  func.func @transform_1(%arg0: i32) -> (i32, i32) {
    %c0_i32 = arith.constant 0 : i32
    %c0_i32_0 = arith.constant 0 : i32
    %c0_i32_1 = arith.constant 0 : i32
    return %c0_i32, %c0_i32_0 : i32, i32
  }
  func.func @transform_2(%arg0: i32) -> (i32, i32) {
    %c0_i32 = arith.constant 0 : i32
    %c0_i32_0 = arith.constant 0 : i32
    %c0_i32_1 = arith.constant 0 : i32
    return %c0_i32, %c0_i32_0 : i32, i32
  }
  func.func @transform_3(%arg0: i32) -> (i32, i32) {
    %c0_i32 = arith.constant 0 : i32
    %c0_i32_0 = arith.constant 0 : i32
    %c0_i32_1 = arith.constant 0 : i32
    return %c0_i32, %c0_i32_0 : i32, i32
  }
  func.func @transform_4(%arg0: i32) -> (i32, i32) {
    %c0_i32 = arith.constant 0 : i32
    %c0_i32_0 = arith.constant 0 : i32
    %c0_i32_1 = arith.constant 0 : i32
    return %c0_i32, %c0_i32_0 : i32, i32
  }
  func.func @transform_5(%arg0: i32) -> (i32, i32) {
    %c0_i32 = arith.constant 0 : i32
    %c0_i32_0 = arith.constant 0 : i32
    %c0_i32_1 = arith.constant 0 : i32
    return %c0_i32, %c0_i32_0 : i32, i32
  }
  func.func @transform_6(%arg0: i32) -> (i32, i32) {
    %c0_i32 = arith.constant 0 : i32
    %c0_i32_0 = arith.constant 0 : i32
    %c0_i32_1 = arith.constant 0 : i32
    return %c0_i32, %c0_i32_0 : i32, i32
  }
  func.func @transform_7(%arg0: i32) -> (i32, i32) {
    %c0_i32 = arith.constant 0 : i32
    %c0_i32_0 = arith.constant 0 : i32
    return %arg0, %c0_i32 : i32, i32
  }
}

module attributes {stable_mosaic.version = 11 : i64} {
  func.func @_fused_head_kernel(%arg0: i32, %arg1: memref<8x32xf32, #tpu.memory_space<vmem>>, %arg2: memref<32x32xbf16, #tpu.memory_space<vmem>>, %arg3: memref<1x32xf32, #tpu.memory_space<vmem>>, %arg4: memref<32x32xbf16, #tpu.memory_space<vmem>>, %arg5: memref<1x32xf32, #tpu.memory_space<vmem>>, %arg6: memref<32x16xbf16, #tpu.memory_space<vmem>>, %arg7: memref<1x16xf32, #tpu.memory_space<vmem>>, %arg8: memref<8x16xf32, #tpu.memory_space<vmem>>) attributes {dimension_semantics = [#tpu.dimension_semantics<parallel>], iteration_bounds = array<i64: 1>, scalar_prefetch = 0 : i64, scratch_operands = 0 : i64, tpu.core_type = #tpu.core_type<tc>, window_params = [{transform_indices = @transform_0, window_bounds = array<i64: 8, 32>}, {pipeline_mode = #tpu.pipeline_mode<synchronous>, transform_indices = @transform_1, window_bounds = array<i64: 32, 32>}, {pipeline_mode = #tpu.pipeline_mode<synchronous>, transform_indices = @transform_2, window_bounds = array<i64: 1, 32>}, {pipeline_mode = #tpu.pipeline_mode<synchronous>, transform_indices = @transform_3, window_bounds = array<i64: 32, 32>}, {pipeline_mode = #tpu.pipeline_mode<synchronous>, transform_indices = @transform_4, window_bounds = array<i64: 1, 32>}, {pipeline_mode = #tpu.pipeline_mode<synchronous>, transform_indices = @transform_5, window_bounds = array<i64: 32, 16>}, {pipeline_mode = #tpu.pipeline_mode<synchronous>, transform_indices = @transform_6, window_bounds = array<i64: 1, 16>}, {transform_indices = @transform_7, window_bounds = array<i64: 8, 16>}]} {
    %c0 = arith.constant 0 : index
    %c0_0 = arith.constant 0 : index
    %0 = vector.load %arg1[%c0, %c0_0] : memref<8x32xf32, #tpu.memory_space<vmem>>, vector<8x32xf32>
    %c0_1 = arith.constant 0 : index
    %c0_2 = arith.constant 0 : index
    %1 = vector.load %arg2[%c0_1, %c0_2] : memref<32x32xbf16, #tpu.memory_space<vmem>>, vector<32x32xbf16>
    %c0_3 = arith.constant 0 : index
    %c0_4 = arith.constant 0 : index
    %2 = vector.load %arg3[%c0_3, %c0_4] : memref<1x32xf32, #tpu.memory_space<vmem>>, vector<1x32xf32>
    %3 = arith.truncf %0 : vector<8x32xf32> to vector<8x32xbf16>
    %cst = arith.constant dense<0.000000e+00> : vector<8x32xf32>
    %4 = tpu.matmul %3, %1, %cst {dimension_numbers = #tpu.dot_dimension_numbers<[1], [0], [0], [1], [0, 0, 1, 1], [], []>} : vector<8x32xbf16>, vector<32x32xbf16>, vector<8x32xf32> -> vector<8x32xf32>
    %5 = vector.broadcast %2 : vector<1x32xf32> to vector<8x32xf32>
    %6 = arith.addf %4, %5 : vector<8x32xf32>
    %7 = arith.addf %6, %0 : vector<8x32xf32>
    %cst_5 = arith.constant 0.000000e+00 : f32
    %8 = vector.broadcast %cst_5 : f32 to vector<8x32xf32>
    %9 = arith.maximumf %7, %8 : vector<8x32xf32>
    %c0_6 = arith.constant 0 : index
    %c0_7 = arith.constant 0 : index
    %10 = vector.load %arg4[%c0_6, %c0_7] : memref<32x32xbf16, #tpu.memory_space<vmem>>, vector<32x32xbf16>
    %c0_8 = arith.constant 0 : index
    %c0_9 = arith.constant 0 : index
    %11 = vector.load %arg5[%c0_8, %c0_9] : memref<1x32xf32, #tpu.memory_space<vmem>>, vector<1x32xf32>
    %12 = arith.truncf %9 : vector<8x32xf32> to vector<8x32xbf16>
    %cst_10 = arith.constant dense<0.000000e+00> : vector<8x32xf32>
    %13 = tpu.matmul %12, %10, %cst_10 {dimension_numbers = #tpu.dot_dimension_numbers<[1], [0], [0], [1], [0, 0, 1, 1], [], []>} : vector<8x32xbf16>, vector<32x32xbf16>, vector<8x32xf32> -> vector<8x32xf32>
    %14 = vector.broadcast %11 : vector<1x32xf32> to vector<8x32xf32>
    %15 = arith.addf %13, %14 : vector<8x32xf32>
    %16 = arith.addf %15, %7 : vector<8x32xf32>
    %cst_11 = arith.constant 0.000000e+00 : f32
    %17 = vector.broadcast %cst_11 : f32 to vector<8x32xf32>
    %18 = arith.maximumf %16, %17 : vector<8x32xf32>
    %c0_12 = arith.constant 0 : index
    %c0_13 = arith.constant 0 : index
    %19 = vector.load %arg6[%c0_12, %c0_13] : memref<32x16xbf16, #tpu.memory_space<vmem>>, vector<32x16xbf16>
    %c0_14 = arith.constant 0 : index
    %c0_15 = arith.constant 0 : index
    %20 = vector.load %arg7[%c0_14, %c0_15] : memref<1x16xf32, #tpu.memory_space<vmem>>, vector<1x16xf32>
    %21 = arith.truncf %18 : vector<8x32xf32> to vector<8x32xbf16>
    %cst_16 = arith.constant dense<0.000000e+00> : vector<8x16xf32>
    %22 = tpu.matmul %21, %19, %cst_16 {dimension_numbers = #tpu.dot_dimension_numbers<[1], [0], [0], [1], [0, 0, 1, 1], [], []>} : vector<8x32xbf16>, vector<32x16xbf16>, vector<8x16xf32> -> vector<8x16xf32>
    %23 = vector.broadcast %20 : vector<1x16xf32> to vector<8x16xf32>
    %24 = arith.addf %22, %23 : vector<8x16xf32>
    %c0_17 = arith.constant 0 : index
    %c0_18 = arith.constant 0 : index
    %25 = vector.load %arg8[%c0_17, %c0_18] : memref<8x16xf32, #tpu.memory_space<vmem>>, vector<8x16xf32>
    tpu.vector_store %arg8[%c0_17, %c0_18], %24 {strides = array<i32>} : memref<8x16xf32, #tpu.memory_space<vmem>>, vector<8x16xf32>,
    return
  }
  func.func @transform_0(%arg0: i32) -> (i32, i32) {
    %c0_i32 = arith.constant 0 : i32
    %c0_i32_0 = arith.constant 0 : i32
    return %arg0, %c0_i32 : i32, i32
  }
  func.func @transform_1(%arg0: i32) -> (i32, i32) {
    %c0_i32 = arith.constant 0 : i32
    %c0_i32_0 = arith.constant 0 : i32
    %c0_i32_1 = arith.constant 0 : i32
    return %c0_i32, %c0_i32_0 : i32, i32
  }
  func.func @transform_2(%arg0: i32) -> (i32, i32) {
    %c0_i32 = arith.constant 0 : i32
    %c0_i32_0 = arith.constant 0 : i32
    %c0_i32_1 = arith.constant 0 : i32
    return %c0_i32, %c0_i32_0 : i32, i32
  }
  func.func @transform_3(%arg0: i32) -> (i32, i32) {
    %c0_i32 = arith.constant 0 : i32
    %c0_i32_0 = arith.constant 0 : i32
    %c0_i32_1 = arith.constant 0 : i32
    return %c0_i32, %c0_i32_0 : i32, i32
  }
  func.func @transform_4(%arg0: i32) -> (i32, i32) {
    %c0_i32 = arith.constant 0 : i32
    %c0_i32_0 = arith.constant 0 : i32
    %c0_i32_1 = arith.constant 0 : i32
    return %c0_i32, %c0_i32_0 : i32, i32
  }
  func.func @transform_5(%arg0: i32) -> (i32, i32) {
    %c0_i32 = arith.constant 0 : i32
    %c0_i32_0 = arith.constant 0 : i32
    %c0_i32_1 = arith.constant 0 : i32
    return %c0_i32, %c0_i32_0 : i32, i32
  }
  func.func @transform_6(%arg0: i32) -> (i32, i32) {
    %c0_i32 = arith.constant 0 : i32
    %c0_i32_0 = arith.constant 0 : i32
    %c0_i32_1 = arith.constant 0 : i32
    return %c0_i32, %c0_i32_0 : i32, i32
  }
  func.func @transform_7(%arg0: i32) -> (i32, i32) {
    %c0_i32 = arith.constant 0 : i32
    %c0_i32_0 = arith.constant 0 : i32
    return %arg0, %c0_i32 : i32, i32
  }
}

</mosaic_0001>

<llo_original>
// kernel: prediction_head_forward.1
$region0: #{prediction_head_forward.1}
  #allocation0 [shape = 'u32[]', space=smem, size = 0x4, offset = 0x4, fixed_abs, tag = 'smem constant byte address 0x4 - core index']
  #allocation1 [shape = 'u32[144,128]{1,0:T(1,128)}', space=vmem, size = 0x12000, scoped, tag = 'internal scratch']
  %s0 = inlined_call_operand.vmem [shape: f32[8,32], index: 0, kind: input, shape index: {}]
  %s1 = inlined_call_operand.hbm [shape: bf16[32,32], index: 1, kind: input, shape index: {}]
  %s2 = inlined_call_operand.vmem [shape: f32[1,32], index: 2, kind: input, shape index: {}]
  %s3 = inlined_call_operand.hbm [shape: bf16[32,32], index: 3, kind: input, shape index: {}]
  %s4 = inlined_call_operand.vmem [shape: f32[1,32], index: 4, kind: input, shape index: {}]
  %s5 = inlined_call_operand.vmem [shape: bf16[32,16], index: 5, kind: input, shape index: {}]
  %s6 = inlined_call_operand.vmem [shape: f32[1,16], index: 6, kind: input, shape index: {}]
  %s7 = inlined_call_operand.hbm [shape: f32[8,16], index: 7, kind: output, shape index: {}]
  %s8 = sld [smem:[#allocation0]]
  $region46: #{prediction_head_forward.1} parent=0
    _
  %s10 = ssub.s32 1, %s8
  %s11 = scalar_select 0, %s10, %s8
  $region1: #{prediction_head_forward.1} parent=0
    #allocation2 [shape = 'u8[8192]{0}', space=vmem, size = 0x2000, scoped, tag = 'input window, operand 1, single buffered']
    #allocation3 [shape = 's32[1]{0}', space=sflag, size = 0x4, scoped, tag = 'scoped memory for prediction_head_forward.1']
    #allocation4 [shape = 's32[1]{0}', space=sflag, size = 0x4, scoped, tag = 'scoped memory for prediction_head_forward.1']
    #allocation5 [shape = 'u8[8192]{0}', space=vmem, size = 0x2000, scoped, tag = 'input window, operand 3, single buffered']
    #allocation6 [shape = 's32[1]{0}', space=sflag, size = 0x4, scoped, tag = 'scoped memory for prediction_head_forward.1']
    #allocation7 [shape = 'u8[4096]{0}', space=vmem, size = 0x1000, scoped, tag = 'output window, operand 0, single buffered']
    %12 = vsyncpa [#allocation3], 0
    %13 = vsyncpa [#allocation6], 0
    %14 = vsyncpa [#allocation4], 0
    // Predicated region
    $region2: #{prediction_head_forward.1} parent=1 // pred_check
      _
    $region3: #{prediction_head_forward.1} parent=1 // pred_check_branch
      %16 = sbr.rel (0) target = $region5
    $region4: #{prediction_head_forward.1} parent=1 // pred_region
      _
    $region5: #{prediction_head_forward.1} parent=1 // pred_fallthru
      _
    // Predicated region
    $region6: #{prediction_head_forward.1} parent=1 // pred_check
      _
    $region7: #{prediction_head_forward.1} parent=1 // pred_check_branch
      %18 = sbr.rel (0) target = $region9
    $region8: #{prediction_head_forward.1} parent=1 // pred_region
      %s20 = ssub.s32 256, 256
      %21 = vsyncadd [#allocation3], %s20
      %s22 = sshll.u32 [#allocation2], 4
      %s23 = int_to_ptr.vmem [resolvable:$true] %s22
      %28 = dma.hbm_to_vmem [thread:$0]  %s1, 256, %s23, [#allocation3], 64, 64, 4
    $region9: #{prediction_head_forward.1} parent=1 // pred_fallthru
      _
    // Predicated region
    $region10: #{prediction_head_forward.1} parent=1 // pred_check
      _
    $region11: #{prediction_head_forward.1} parent=1 // pred_check_branch
      %30 = sbr.rel (0) target = $region13
    $region12: #{prediction_head_forward.1} parent=1 // pred_region
      _
    $region13: #{prediction_head_forward.1} parent=1 // pred_fallthru
      _
    // Predicated region
    $region14: #{prediction_head_forward.1} parent=1 // pred_check
      _
    $region15: #{prediction_head_forward.1} parent=1 // pred_check_branch
      %32 = sbr.rel (0) target = $region17
    $region16: #{prediction_head_forward.1} parent=1 // pred_region
      %s34 = ssub.s32 256, 256
      %35 = vsyncadd [#allocation6], %s34
      %s36 = sshll.u32 [#allocation5], 4
      %s37 = int_to_ptr.vmem [resolvable:$true] %s36
      %42 = dma.hbm_to_vmem [thread:$0]  %s3, 256, %s37, [#allocation6], 64, 64, 4
    $region17: #{prediction_head_forward.1} parent=1 // pred_fallthru
      _
    // Predicated region
    $region18: #{prediction_head_forward.1} parent=1 // pred_check
      _
    $region19: #{prediction_head_forward.1} parent=1 // pred_check_branch
      %44 = sbr.rel (0) target = $region21
    $region20: #{prediction_head_forward.1} parent=1 // pred_region
      _
    $region21: #{prediction_head_forward.1} parent=1 // pred_fallthru
      _
    // Predicated region
    $region22: #{prediction_head_forward.1} parent=1 // pred_check
      _
    $region23: #{prediction_head_forward.1} parent=1 // pred_check_branch
      %46 = sbr.rel (0) target = $region25
    $region24: #{prediction_head_forward.1} parent=1 // pred_region
      _
    $region25: #{prediction_head_forward.1} parent=1 // pred_fallthru
      _
    // Predicated region
    $region26: #{prediction_head_forward.1} parent=1 // pred_check
      _
    $region27: #{prediction_head_forward.1} parent=1 // pred_check_branch
      %48 = sbr.rel (0) target = $region29
    $region28: #{prediction_head_forward.1} parent=1 // pred_region
      _
    $region29: #{prediction_head_forward.1} parent=1 // pred_fallthru
      _
    // Predicated region
    $region30: #{prediction_head_forward.1} parent=1 // pred_check
      _
    $region31: #{prediction_head_forward.1} parent=1 // pred_check_branch
      %50 = sbr.rel (0) target = $region33
    $region32: #{prediction_head_forward.1} parent=1 // pred_region
      %51 = dma.done [#allocation3], 256
    $region33: #{prediction_head_forward.1} parent=1 // pred_fallthru
      _
    // Predicated region
    $region34: #{prediction_head_forward.1} parent=1 // pred_check
      _
    $region35: #{prediction_head_forward.1} parent=1 // pred_check_branch
      %53 = sbr.rel (0) target = $region37
    $region36: #{prediction_head_forward.1} parent=1 // pred_region
      %54 = dma.done [#allocation6], 256
    $region37: #{prediction_head_forward.1} parent=1 // pred_fallthru
      _
    %v56 = vld [vmem:[%s0] sm:$0xff]
    %v57 = vld [vmem:[#allocation2] sm:$0xf]
    %v58 = vld [vmem:[#allocation2 + $0x4] sm:$0xf]
    %v59 = vld [vmem:[#allocation2 + $0x8] sm:$0xf]
    %v60 = vld [vmem:[#allocation2 + $0xc] sm:$0xf]
    %v61 = vld [vmem:[%s2] sm:$0x1]
    %v62 = vpack.c.bf16 %v56, %v56
    %v64 = vlaneseq
    %v65 = vshrl.u32 %v64, 7
    %v66 = vsub.s32 0, %v65
    %v67 = vrot.slane %v61, %v66
    %v73 = vunpack.c.l.b16 %v57
    %v74 = vunpack.c.l.b16 %v58
    %v75 = vunpack.c.l.b16 %v59
    %v76 = vunpack.c.l.b16 %v60
    %v77 = vpack.c.b16 %v74, %v73
    %v78 = vpack.c.b16 %v76, %v75
    %vm81 = vcmask 261120
    %v83 = vsel %vm81, %v62, 0
    %85 = vmatprep.subr.bf16.mxu0 0
    %86 = vmatpush1.bf16.msra.mxu0 %v77
    %87 = vmatprep.subr.bf16.mxu0 0
    %88 = vmatpush1.bf16.msra.mxu0 %v78
    %89 = vmatprep.subr.bf16.mxu0 0
    %90 = vmatpush1.bf16.msra.mxu0 0
    %91 = vmatprep.subr.bf16.mxu0 0
    %92 = vmatpush1.bf16.msra.mxu0 0
    %93 = vmatprep.subr.bf16.mxu0 0
    %94 = vmatpush1.bf16.msra.mxu0 0
    %95 = vmatprep.subr.bf16.mxu0 0
    %96 = vmatpush1.bf16.msra.mxu0 0
    %97 = vmatprep.subr.bf16.mxu0 0
    %98 = vmatpush1.bf16.msra.mxu0 0
    %99 = vmatprep.subr.bf16.mxu0 0
    %100 = vmatpush1.bf16.msra.mxu0 0
    %101 = vmatprep.subr.bf16.mxu0 0
    %102 = vmatpush1.bf16.msra.mxu0 0
    %103 = vmatprep.subr.bf16.mxu0 0
    %104 = vmatpush1.bf16.msra.mxu0 0
    %105 = vmatprep.subr.bf16.mxu0 0
    %106 = vmatpush1.bf16.msra.mxu0 0
    %107 = vmatprep.subr.bf16.mxu0 0
    %108 = vmatpush1.bf16.msra.mxu0 0
    %109 = vmatprep.subr.bf16.mxu0 0
    %110 = vmatpush1.bf16.msra.mxu0 0
    %111 = vmatprep.subr.bf16.mxu0 0
    %112 = vmatpush1.bf16.msra.mxu0 0
    %113 = vmatprep.subr.bf16.mxu0 0
    %114 = vmatpush1.bf16.msra.mxu0 0
    %115 = vmatprep.subr.bf16.mxu0 0
    %116 = vmatpush1.bf16.msra.mxu0 0
    %117 = vmatprep.mubr.bf16.mxu0 0
    %118 = vmatmul.mubr.bf16.gmra.mrb[0].mxu0 %v83
    %v119 = vpop.f32.mrb[0].mxu0
    %v120 = vadd.f32 %v67, %v119
    %v121 = vpop.f32.mrb[0].mxu0
    %v122 = vpop.f32.mrb[0].mxu0
    %v123 = vpop.f32.mrb[0].mxu0
    %124 = vdwg.mxu0
    %v125 = vadd.f32 %v120, %v56
    %v126 = vmax.f32 %v125, 0.0
    %v127 = vld [vmem:[#allocation5] sm:$0xf]
    %v128 = vld [vmem:[#allocation5 + $0x4] sm:$0xf]
    %v129 = vld [vmem:[#allocation5 + $0x8] sm:$0xf]
    %v130 = vld [vmem:[#allocation5 + $0xc] sm:$0xf]
    %v131 = vld [vmem:[%s4] sm:$0x1]
    %v132 = vpack.c.bf16 %v126, %v126
    %v134 = vlaneseq
    %v135 = vshrl.u32 %v134, 7
    %v136 = vsub.s32 0, %v135
    %v137 = vrot.slane %v131, %v136
    %v143 = vunpack.c.l.b16 %v127
    %v144 = vunpack.c.l.b16 %v128
    %v145 = vunpack.c.l.b16 %v129
    %v146 = vunpack.c.l.b16 %v130
    %v147 = vpack.c.b16 %v144, %v143
    %v148 = vpack.c.b16 %v146, %v145
    %v152 = vsel %vm81, %v132, 0
    %154 = vmatprep.subr.bf16.mxu0 0
    %155 = vmatpush1.bf16.msra.mxu0 %v147
    %156 = vmatprep.subr.bf16.mxu0 0
    %157 = vmatpush1.bf16.msra.mxu0 %v148
    %158 = vmatprep.subr.bf16.mxu0 0
    %159 = vmatpush1.bf16.msra.mxu0 0
    %160 = vmatprep.subr.bf16.mxu0 0
    %161 = vmatpush1.bf16.msra.mxu0 0
    %162 = vmatprep.subr.bf16.mxu0 0
    %163 = vmatpush1.bf16.msra.mxu0 0
    %164 = vmatprep.subr.bf16.mxu0 0
    %165 = vmatpush1.bf16.msra.mxu0 0
    %166 = vmatprep.subr.bf16.mxu0 0
    %167 = vmatpush1.bf16.msra.mxu0 0
    %168 = vmatprep.subr.bf16.mxu0 0
    %169 = vmatpush1.bf16.msra.mxu0 0
    %170 = vmatprep.subr.bf16.mxu0 0
    %171 = vmatpush1.bf16.msra.mxu0 0
    %172 = vmatprep.subr.bf16.mxu0 0
    %173 = vmatpush1.bf16.msra.mxu0 0
    %174 = vmatprep.subr.bf16.mxu0 0
    %175 = vmatpush1.bf16.msra.mxu0 0
    %176 = vmatprep.subr.bf16.mxu0 0
    %177 = vmatpush1.bf16.msra.mxu0 0
    %178 = vmatprep.subr.bf16.mxu0 0
    %179 = vmatpush1.bf16.msra.mxu0 0
    %180 = vmatprep.subr.bf16.mxu0 0
    %181 = vmatpush1.bf16.msra.mxu0 0
    %182 = vmatprep.subr.bf16.mxu0 0
    %183 = vmatpush1.bf16.msra.mxu0 0
    %184 = vmatprep.subr.bf16.mxu0 0
    %185 = vmatpush1.bf16.msra.mxu0 0
    %186 = vmatprep.mubr.bf16.mxu0 0
    %187 = vmatmul.mubr.bf16.gmra.mrb[0].mxu0 %v152
    %v188 = vpop.f32.mrb[0].mxu0
    %v189 = vadd.f32 %v137, %v188
    %v190 = vpop.f32.mrb[0].mxu0
    %v191 = vpop.f32.mrb[0].mxu0
    %v192 = vpop.f32.mrb[0].mxu0
    %193 = vdwg.mxu0
    %v194 = vadd.f32 %v189, %v125
    %v195 = vmax.f32 %v194, 0.0
    %v196 = vld [vmem:[%s5] sm:$0xf]
    %v197 = vld [vmem:[%s5 + $0x4] sm:$0xf]
    %v198 = vld [vmem:[%s5 + $0x8] sm:$0xf]
    %v199 = vld [vmem:[%s5 + $0xc] sm:$0xf]
    %v200 = vld [vmem:[%s6] sm:$0x1]
    %v201 = vpack.c.bf16 %v195, %v195
    %v203 = vlaneseq
    %v204 = vshrl.u32 %v203, 7
    %v205 = vsub.s32 0, %v204
    %v206 = vrot.slane %v200, %v205
    %v212 = vunpack.c.l.b16 %v196
    %v213 = vunpack.c.l.b16 %v197
    %v214 = vunpack.c.l.b16 %v198
    %v215 = vunpack.c.l.b16 %v199
    %v216 = vpack.c.b16 %v213, %v212
    %v217 = vpack.c.b16 %v215, %v214
    %v221 = vsel %vm81, %v201, 0
    %223 = vmatprep.subr.bf16.mxu0 0
    %224 = vmatpush1.bf16.msra.mxu0 %v216
    %225 = vmatprep.subr.bf16.mxu0 0
    %226 = vmatpush1.bf16.msra.mxu0 %v217
    %227 = vmatprep.subr.bf16.mxu0 0
    %228 = vmatpush1.bf16.msra.mxu0 0
    %229 = vmatprep.subr.bf16.mxu0 0
    %230 = vmatpush1.bf16.msra.mxu0 0
    %231 = vmatprep.subr.bf16.mxu0 0
    %232 = vmatpush1.bf16.msra.mxu0 0
    %233 = vmatprep.subr.bf16.mxu0 0
    %234 = vmatpush1.bf16.msra.mxu0 0
    %235 = vmatprep.subr.bf16.mxu0 0
    %236 = vmatpush1.bf16.msra.mxu0 0
    %237 = vmatprep.subr.bf16.mxu0 0
    %238 = vmatpush1.bf16.msra.mxu0 0
    %239 = vmatprep.subr.bf16.mxu0 0
    %240 = vmatpush1.bf16.msra.mxu0 0
    %241 = vmatprep.subr.bf16.mxu0 0
    %242 = vmatpush1.bf16.msra.mxu0 0
    %243 = vmatprep.subr.bf16.mxu0 0
    %244 = vmatpush1.bf16.msra.mxu0 0
    %245 = vmatprep.subr.bf16.mxu0 0
    %246 = vmatpush1.bf16.msra.mxu0 0
    %247 = vmatprep.subr.bf16.mxu0 0
    %248 = vmatpush1.bf16.msra.mxu0 0
    %249 = vmatprep.subr.bf16.mxu0 0
    %250 = vmatpush1.bf16.msra.mxu0 0
    %251 = vmatprep.subr.bf16.mxu0 0
    %252 = vmatpush1.bf16.msra.mxu0 0
    %253 = vmatprep.subr.bf16.mxu0 0
    %254 = vmatpush1.bf16.msra.mxu0 0
    %255 = vmatprep.mubr.bf16.mxu0 0
    %256 = vmatmul.mubr.bf16.gmra.mrb[0].mxu0 %v221
    %v257 = vpop.f32.mrb[0].mxu0
    %v258 = vadd.f32 %v206, %v257
    %v259 = vpop.f32.mrb[0].mxu0
    %v260 = vpop.f32.mrb[0].mxu0
    %v261 = vpop.f32.mrb[0].mxu0
    %262 = vdwg.mxu0
    %vm263 = vcmask 130048
    %264 = vst.msk [vmem:[#allocation7] sm:$0xff] %vm263, %v258
    // Predicated region
    $region38: #{prediction_head_forward.1} parent=1 // pred_check
      _
    $region39: #{prediction_head_forward.1} parent=1 // pred_check_branch
      %266 = sbr.rel (0) target = $region41
    $region40: #{prediction_head_forward.1} parent=1 // pred_region
      %s268 = ssub.s32 128, 128
      %269 = vsyncadd [#allocation4], %s268
      %s271 = sshll.u32 [#allocation7], 4
      %s272 = int_to_ptr.vmem [resolvable:$true] %s271
      %274 = dma.vmem_to_hbm [thread:$0]  %s272, 128, %s7, [#allocation4]
    $region41: #{prediction_head_forward.1} parent=1 // pred_fallthru
      _
    // Predicated region
    $region42: #{prediction_head_forward.1} parent=1 // pred_check
      _
    $region43: #{prediction_head_forward.1} parent=1 // pred_check_branch
      %276 = sbr.rel (0) target = $region45
    $region44: #{prediction_head_forward.1} parent=1 // pred_region
      %277 = dma.done [#allocation4], 128
    $region45: #{prediction_head_forward.1} parent=1 // pred_fallthru
      _
    %278 = vsyncpa [#allocation3], 1
    %279 = vsyncpa [#allocation6], 1
    %280 = vsyncpa [#allocation4], 1

// kernel: prediction_head_forward.1
$region0: #{prediction_head_forward.1}
  #allocation0 [shape = 'u32[]', space=smem, size = 0x4, offset = 0x4, fixed_abs, tag = 'smem constant byte address 0x4 - core index']
  #allocation1 [shape = 'u32[144,128]{1,0:T(1,128)}', space=vmem, size = 0x12000, scoped, tag = 'internal scratch']
  %s0 = inlined_call_operand.vmem [shape: f32[8,32], index: 0, kind: input, shape index: {}]
  %s1 = inlined_call_operand.hbm [shape: bf16[32,32], index: 1, kind: input, shape index: {}]
  %s2 = inlined_call_operand.vmem [shape: f32[1,32], index: 2, kind: input, shape index: {}]
  %s3 = inlined_call_operand.hbm [shape: bf16[32,32], index: 3, kind: input, shape index: {}]
  %s4 = inlined_call_operand.vmem [shape: f32[1,32], index: 4, kind: input, shape index: {}]
  %s5 = inlined_call_operand.vmem [shape: bf16[32,16], index: 5, kind: input, shape index: {}]
  %s6 = inlined_call_operand.vmem [shape: f32[1,16], index: 6, kind: input, shape index: {}]
  %s7 = inlined_call_operand.hbm [shape: f32[8,16], index: 7, kind: output, shape index: {}]
  %s8 = sld [smem:[#allocation0]]
  $region46: #{prediction_head_forward.1} parent=0
    _
  %s10 = ssub.s32 1, %s8
  %s11 = scalar_select 0, %s10, %s8
  $region1: #{prediction_head_forward.1} parent=0
    #allocation2 [shape = 'u8[8192]{0}', space=vmem, size = 0x2000, scoped, tag = 'input window, operand 1, single buffered']
    #allocation3 [shape = 's32[1]{0}', space=sflag, size = 0x4, scoped, tag = 'scoped memory for prediction_head_forward.1']
    #allocation4 [shape = 's32[1]{0}', space=sflag, size = 0x4, scoped, tag = 'scoped memory for prediction_head_forward.1']
    #allocation5 [shape = 'u8[8192]{0}', space=vmem, size = 0x2000, scoped, tag = 'input window, operand 3, single buffered']
    #allocation6 [shape = 's32[1]{0}', space=sflag, size = 0x4, scoped, tag = 'scoped memory for prediction_head_forward.1']
    #allocation7 [shape = 'u8[4096]{0}', space=vmem, size = 0x1000, scoped, tag = 'output window, operand 0, single buffered']
    %12 = vsyncpa [#allocation3], 0
    %13 = vsyncpa [#allocation6], 0
    %14 = vsyncpa [#allocation4], 0
    // Predicated region
    $region2: #{prediction_head_forward.1} parent=1 // pred_check
      _
    $region3: #{prediction_head_forward.1} parent=1 // pred_check_branch
      %16 = sbr.rel (0) target = $region5
    $region4: #{prediction_head_forward.1} parent=1 // pred_region
      _
    $region5: #{prediction_head_forward.1} parent=1 // pred_fallthru
      _
    // Predicated region
    $region6: #{prediction_head_forward.1} parent=1 // pred_check
      _
    $region7: #{prediction_head_forward.1} parent=1 // pred_check_branch
      %18 = sbr.rel (0) target = $region9
    $region8: #{prediction_head_forward.1} parent=1 // pred_region
      %s20 = ssub.s32 256, 256
      %21 = vsyncadd [#allocation3], %s20
      %s22 = sshll.u32 [#allocation2], 4
      %s23 = int_to_ptr.vmem [resolvable:$true] %s22
      %28 = dma.hbm_to_vmem [thread:$0]  %s1, 256, %s23, [#allocation3], 64, 64, 4
    $region9: #{prediction_head_forward.1} parent=1 // pred_fallthru
      _
    // Predicated region
    $region10: #{prediction_head_forward.1} parent=1 // pred_check
      _
    $region11: #{prediction_head_forward.1} parent=1 // pred_check_branch
      %30 = sbr.rel (0) target = $region13
    $region12: #{prediction_head_forward.1} parent=1 // pred_region
      _
    $region13: #{prediction_head_forward.1} parent=1 // pred_fallthru
      _
    // Predicated region
    $region14: #{prediction_head_forward.1} parent=1 // pred_check
      _
    $region15: #{prediction_head_forward.1} parent=1 // pred_check_branch
      %32 = sbr.rel (0) target = $region17
    $region16: #{prediction_head_forward.1} parent=1 // pred_region
      %s34 = ssub.s32 256, 256
      %35 = vsyncadd [#allocation6], %s34
      %s36 = sshll.u32 [#allocation5], 4
      %s37 = int_to_ptr.vmem [resolvable:$true] %s36
      %42 = dma.hbm_to_vmem [thread:$0]  %s3, 256, %s37, [#allocation6], 64, 64, 4
    $region17: #{prediction_head_forward.1} parent=1 // pred_fallthru
      _
    // Predicated region
    $region18: #{prediction_head_forward.1} parent=1 // pred_check
      _
    $region19: #{prediction_head_forward.1} parent=1 // pred_check_branch
      %44 = sbr.rel (0) target = $region21
    $region20: #{prediction_head_forward.1} parent=1 // pred_region
      _
    $region21: #{prediction_head_forward.1} parent=1 // pred_fallthru
      _
    // Predicated region
    $region22: #{prediction_head_forward.1} parent=1 // pred_check
      _
    $region23: #{prediction_head_forward.1} parent=1 // pred_check_branch
      %46 = sbr.rel (0) target = $region25
    $region24: #{prediction_head_forward.1} parent=1 // pred_region
      _
    $region25: #{prediction_head_forward.1} parent=1 // pred_fallthru
      _
    // Predicated region
    $region26: #{prediction_head_forward.1} parent=1 // pred_check
      _
    $region27: #{prediction_head_forward.1} parent=1 // pred_check_branch
      %48 = sbr.rel (0) target = $region29
    $region28: #{prediction_head_forward.1} parent=1 // pred_region
      _
    $region29: #{prediction_head_forward.1} parent=1 // pred_fallthru
      _
    // Predicated region
    $region30: #{prediction_head_forward.1} parent=1 // pred_check
      _
    $region31: #{prediction_head_forward.1} parent=1 // pred_check_branch
      %50 = sbr.rel (0) target = $region33
    $region32: #{prediction_head_forward.1} parent=1 // pred_region
      %51 = dma.done [#allocation3], 256
    $region33: #{prediction_head_forward.1} parent=1 // pred_fallthru
      _
    // Predicated region
    $region34: #{prediction_head_forward.1} parent=1 // pred_check
      _
    $region35: #{prediction_head_forward.1} parent=1 // pred_check_branch
      %53 = sbr.rel (0) target = $region37
    $region36: #{prediction_head_forward.1} parent=1 // pred_region
      %54 = dma.done [#allocation6], 256
    $region37: #{prediction_head_forward.1} parent=1 // pred_fallthru
      _
    %v56 = vld [vmem:[%s0] sm:$0xff]
    %v57 = vld [vmem:[#allocation2] sm:$0xf]
    %v58 = vld [vmem:[#allocation2 + $0x4] sm:$0xf]
    %v59 = vld [vmem:[#allocation2 + $0x8] sm:$0xf]
    %v60 = vld [vmem:[#allocation2 + $0xc] sm:$0xf]
    %v61 = vld [vmem:[%s2] sm:$0x1]
    %v62 = vpack.c.bf16 %v56, %v56
    %v64 = vlaneseq
    %v65 = vshrl.u32 %v64, 7
    %v66 = vsub.s32 0, %v65
    %v67 = vrot.slane %v61, %v66
    %v73 = vunpack.c.l.b16 %v57
    %v74 = vunpack.c.l.b16 %v58
    %v75 = vunpack.c.l.b16 %v59
    %v76 = vunpack.c.l.b16 %v60
    %v77 = vpack.c.b16 %v74, %v73
    %v78 = vpack.c.b16 %v76, %v75
    %vm81 = vcmask 261120
    %v83 = vsel %vm81, %v62, 0
    %85 = vmatprep.subr.bf16.mxu0 0
    %86 = vmatpush1.bf16.msra.mxu0 %v77
    %87 = vmatprep.subr.bf16.mxu0 0
    %88 = vmatpush1.bf16.msra.mxu0 %v78
    %89 = vmatprep.subr.bf16.mxu0 0
    %90 = vmatpush1.bf16.msra.mxu0 0
    %91 = vmatprep.subr.bf16.mxu0 0
    %92 = vmatpush1.bf16.msra.mxu0 0
    %93 = vmatprep.subr.bf16.mxu0 0
    %94 = vmatpush1.bf16.msra.mxu0 0
    %95 = vmatprep.subr.bf16.mxu0 0
    %96 = vmatpush1.bf16.msra.mxu0 0
    %97 = vmatprep.subr.bf16.mxu0 0
    %98 = vmatpush1.bf16.msra.mxu0 0
    %99 = vmatprep.subr.bf16.mxu0 0
    %100 = vmatpush1.bf16.msra.mxu0 0
    %101 = vmatprep.subr.bf16.mxu0 0
    %102 = vmatpush1.bf16.msra.mxu0 0
    %103 = vmatprep.subr.bf16.mxu0 0
    %104 = vmatpush1.bf16.msra.mxu0 0
    %105 = vmatprep.subr.bf16.mxu0 0
    %106 = vmatpush1.bf16.msra.mxu0 0
    %107 = vmatprep.subr.bf16.mxu0 0
    %108 = vmatpush1.bf16.msra.mxu0 0
    %109 = vmatprep.subr.bf16.mxu0 0
    %110 = vmatpush1.bf16.msra.mxu0 0
    %111 = vmatprep.subr.bf16.mxu0 0
    %112 = vmatpush1.bf16.msra.mxu0 0
    %113 = vmatprep.subr.bf16.mxu0 0
    %114 = vmatpush1.bf16.msra.mxu0 0
    %115 = vmatprep.subr.bf16.mxu0 0
    %116 = vmatpush1.bf16.msra.mxu0 0
    %117 = vmatprep.mubr.bf16.mxu0 0
    %118 = vmatmul.mubr.bf16.gmra.mrb[0].mxu0 %v83
    %v119 = vpop.f32.mrb[0].mxu0
    %v120 = vadd.f32 %v67, %v119
    %v121 = vpop.f32.mrb[0].mxu0
    %v122 = vpop.f32.mrb[0].mxu0
    %v123 = vpop.f32.mrb[0].mxu0
    %124 = vdwg.mxu0
    %v125 = vadd.f32 %v120, %v56
    %v126 = vmax.f32 %v125, 0.0
    %v127 = vld [vmem:[#allocation5] sm:$0xf]
    %v128 = vld [vmem:[#allocation5 + $0x4] sm:$0xf]
    %v129 = vld [vmem:[#allocation5 + $0x8] sm:$0xf]
    %v130 = vld [vmem:[#allocation5 + $0xc] sm:$0xf]
    %v131 = vld [vmem:[%s4] sm:$0x1]
    %v132 = vpack.c.bf16 %v126, %v126
    %v134 = vlaneseq
    %v135 = vshrl.u32 %v134, 7
    %v136 = vsub.s32 0, %v135
    %v137 = vrot.slane %v131, %v136
    %v143 = vunpack.c.l.b16 %v127
    %v144 = vunpack.c.l.b16 %v128
    %v145 = vunpack.c.l.b16 %v129
    %v146 = vunpack.c.l.b16 %v130
    %v147 = vpack.c.b16 %v144, %v143
    %v148 = vpack.c.b16 %v146, %v145
    %v152 = vsel %vm81, %v132, 0
    %154 = vmatprep.subr.bf16.mxu0 0
    %155 = vmatpush1.bf16.msra.mxu0 %v147
    %156 = vmatprep.subr.bf16.mxu0 0
    %157 = vmatpush1.bf16.msra.mxu0 %v148
    %158 = vmatprep.subr.bf16.mxu0 0
    %159 = vmatpush1.bf16.msra.mxu0 0
    %160 = vmatprep.subr.bf16.mxu0 0
    %161 = vmatpush1.bf16.msra.mxu0 0
    %162 = vmatprep.subr.bf16.mxu0 0
    %163 = vmatpush1.bf16.msra.mxu0 0
    %164 = vmatprep.subr.bf16.mxu0 0
    %165 = vmatpush1.bf16.msra.mxu0 0
    %166 = vmatprep.subr.bf16.mxu0 0
    %167 = vmatpush1.bf16.msra.mxu0 0
    %168 = vmatprep.subr.bf16.mxu0 0
    %169 = vmatpush1.bf16.msra.mxu0 0
    %170 = vmatprep.subr.bf16.mxu0 0
    %171 = vmatpush1.bf16.msra.mxu0 0
    %172 = vmatprep.subr.bf16.mxu0 0
    %173 = vmatpush1.bf16.msra.mxu0 0
    %174 = vmatprep.subr.bf16.mxu0 0
    %175 = vmatpush1.bf16.msra.mxu0 0
    %176 = vmatprep.subr.bf16.mxu0 0
    %177 = vmatpush1.bf16.msra.mxu0 0
    %178 = vmatprep.subr.bf16.mxu0 0
    %179 = vmatpush1.bf16.msra.mxu0 0
    %180 = vmatprep.subr.bf16.mxu0 0
    %181 = vmatpush1.bf16.msra.mxu0 0
    %182 = vmatprep.subr.bf16.mxu0 0
    %183 = vmatpush1.bf16.msra.mxu0 0
    %184 = vmatprep.subr.bf16.mxu0 0
    %185 = vmatpush1.bf16.msra.mxu0 0
    %186 = vmatprep.mubr.bf16.mxu0 0
    %187 = vmatmul.mubr.bf16.gmra.mrb[0].mxu0 %v152
    %v188 = vpop.f32.mrb[0].mxu0
    %v189 = vadd.f32 %v137, %v188
    %v190 = vpop.f32.mrb[0].mxu0
    %v191 = vpop.f32.mrb[0].mxu0
    %v192 = vpop.f32.mrb[0].mxu0
    %193 = vdwg.mxu0
    %v194 = vadd.f32 %v189, %v125
    %v195 = vmax.f32 %v194, 0.0
    %v196 = vld [vmem:[%s5] sm:$0xf]
    %v197 = vld [vmem:[%s5 + $0x4] sm:$0xf]
    %v198 = vld [vmem:[%s5 + $0x8] sm:$0xf]
    %v199 = vld [vmem:[%s5 + $0xc] sm:$0xf]
    %v200 = vld [vmem:[%s6] sm:$0x1]
    %v201 = vpack.c.bf16 %v195, %v195
    %v203 = vlaneseq
    %v204 = vshrl.u32 %v203, 7
    %v205 = vsub.s32 0, %v204
    %v206 = vrot.slane %v200, %v205
    %v212 = vunpack.c.l.b16 %v196
    %v213 = vunpack.c.l.b16 %v197
    %v214 = vunpack.c.l.b16 %v198
    %v215 = vunpack.c.l.b16 %v199
    %v216 = vpack.c.b16 %v213, %v212
    %v217 = vpack.c.b16 %v215, %v214
    %v221 = vsel %vm81, %v201, 0
    %223 = vmatprep.subr.bf16.mxu0 0
    %224 = vmatpush1.bf16.msra.mxu0 %v216
    %225 = vmatprep.subr.bf16.mxu0 0
    %226 = vmatpush1.bf16.msra.mxu0 %v217
    %227 = vmatprep.subr.bf16.mxu0 0
    %228 = vmatpush1.bf16.msra.mxu0 0
    %229 = vmatprep.subr.bf16.mxu0 0
    %230 = vmatpush1.bf16.msra.mxu0 0
    %231 = vmatprep.subr.bf16.mxu0 0
    %232 = vmatpush1.bf16.msra.mxu0 0
    %233 = vmatprep.subr.bf16.mxu0 0
    %234 = vmatpush1.bf16.msra.mxu0 0
    %235 = vmatprep.subr.bf16.mxu0 0
    %236 = vmatpush1.bf16.msra.mxu0 0
    %237 = vmatprep.subr.bf16.mxu0 0
    %238 = vmatpush1.bf16.msra.mxu0 0
    %239 = vmatprep.subr.bf16.mxu0 0
    %240 = vmatpush1.bf16.msra.mxu0 0
    %241 = vmatprep.subr.bf16.mxu0 0
    %242 = vmatpush1.bf16.msra.mxu0 0
    %243 = vmatprep.subr.bf16.mxu0 0
    %244 = vmatpush1.bf16.msra.mxu0 0
    %245 = vmatprep.subr.bf16.mxu0 0
    %246 = vmatpush1.bf16.msra.mxu0 0
    %247 = vmatprep.subr.bf16.mxu0 0
    %248 = vmatpush1.bf16.msra.mxu0 0
    %249 = vmatprep.subr.bf16.mxu0 0
    %250 = vmatpush1.bf16.msra.mxu0 0
    %251 = vmatprep.subr.bf16.mxu0 0
    %252 = vmatpush1.bf16.msra.mxu0 0
    %253 = vmatprep.subr.bf16.mxu0 0
    %254 = vmatpush1.bf16.msra.mxu0 0
    %255 = vmatprep.mubr.bf16.mxu0 0
    %256 = vmatmul.mubr.bf16.gmra.mrb[0].mxu0 %v221
    %v257 = vpop.f32.mrb[0].mxu0
    %v258 = vadd.f32 %v206, %v257
    %v259 = vpop.f32.mrb[0].mxu0
    %v260 = vpop.f32.mrb[0].mxu0
    %v261 = vpop.f32.mrb[0].mxu0
    %262 = vdwg.mxu0
    %vm263 = vcmask 130048
    %264 = vst.msk [vmem:[#allocation7] sm:$0xff] %vm263, %v258
    // Predicated region
    $region38: #{prediction_head_forward.1} parent=1 // pred_check
      _
    $region39: #{prediction_head_forward.1} parent=1 // pred_check_branch
      %266 = sbr.rel (0) target = $region41
    $region40: #{prediction_head_forward.1} parent=1 // pred_region
      %s268 = ssub.s32 128, 128
      %269 = vsyncadd [#allocation4], %s268
      %s271 = sshll.u32 [#allocation7], 4
      %s272 = int_to_ptr.vmem [resolvable:$true] %s271
      %274 = dma.vmem_to_hbm [thread:$0]  %s272, 128, %s7, [#allocation4]
    $region41: #{prediction_head_forward.1} parent=1 // pred_fallthru
      _
    // Predicated region
    $region42: #{prediction_head_forward.1} parent=1 // pred_check
      _
    $region43: #{prediction_head_forward.1} parent=1 // pred_check_branch
      %276 = sbr.rel (0) target = $region45
    $region44: #{prediction_head_forward.1} parent=1 // pred_region
      %277 = dma.done [#allocation4], 128
    $region45: #{prediction_head_forward.1} parent=1 // pred_fallthru
      _
    %278 = vsyncpa [#allocation3], 1
    %279 = vsyncpa [#allocation6], 1
    %280 = vsyncpa [#allocation4], 1

</llo_original>
